<compile_context>
chip_gen: v5e
topology: v5e:2x2
jax: 0.10.0
libtpu: 0.0.40
codegen_flags: <defaults>
</compile_context>

<pallas_src>
import functools

import jax
import jax.numpy as jnp
import numpy as np
from jax.experimental import pallas as pl
from jax.experimental.pallas import tpu as pltpu


# ----------------------------------------------------------------------------
# Kernel: 3 fused 128-lane matmuls + tanh + 2-class log-softmax + select,
# packed into a narrow lane-contiguous (TB, 8) output tile.
# ----------------------------------------------------------------------------
def _actor_critic_kernel(x_ref, a_ref, w1_ref, w2_ref, w3_ref, b_ref, out_ref):
    cdt = w2_ref.dtype                               # compute dtype (f32 or bf16)
    x = x_ref[...].astype(cdt)                       # (TB, 4)
    acts = a_ref[...]                                # (TB, 1) int32 action ids

    b1 = b_ref[0:1, :]                               # (1, 128), f32
    b2 = b_ref[8:9, :]
    b3 = b_ref[16:17, :]

    h1 = jnp.tanh(jnp.dot(x, w1_ref[...],
                          preferred_element_type=jnp.float32) + b1)          # (TB,128)
    h2 = jnp.tanh(jnp.dot(h1.astype(cdt), w2_ref[...],
                          preferred_element_type=jnp.float32) + b2)          # (TB,128)
    head = jnp.dot(h2.astype(cdt), w3_ref[...],
                   preferred_element_type=jnp.float32) + b3                  # (TB,128)

    logit0 = head[:, 2:3]                            # action logits
    logit1 = head[:, 3:4]

    # 2-class log-softmax; probs via exp(log_prob) -> EUP, no divide needed.
    m = jnp.maximum(logit0, logit1)
    log_sum = jnp.log(jnp.exp(logit0 - m) + jnp.exp(logit1 - m))
    logp0 = logit0 - m - log_sum
    logp1 = logit1 - m - log_sum
    p0 = jnp.exp(logp0)
    p1 = jnp.exp(logp1)

    # gather(1, actions) as a single vselect (no one-hot, no -inf*0 hazard).
    log_prob = jnp.where(acts == 0, logp0, logp1)    # (TB,1)

    # head[:, 0:8]: col 0 = value (already there), cols 1 and 4:8 are zero by
    # construction of the packed head weights -> only overwrite cols 1..3.
    col = jax.lax.broadcasted_iota(jnp.int32, out_ref.shape, 1)
    out = head[:, 0:8]
    out = jnp.where(col == 1, log_prob, out)
    out = jnp.where(col == 2, p0, out)
    out = jnp.where(col == 3, p1, out)
    out_ref[...] = out


# ----------------------------------------------------------------------------
# Wrapper: batch-tiled grid, weights resident across the grid.
# ----------------------------------------------------------------------------
def _round_up(x, m):
    return (x + m - 1) // m * m


@functools.partial(jax.jit, static_argnames=("block_b", "compute_dtype"))
def actor_critic_forward(obs, actions, packed_params, *, block_b=4096,
                         compute_dtype=jnp.float32):
    w1, w2, w3, b_all = packed_params
    B = obs.shape[0]

    block_b = max(8, _round_up(block_b, 8))
    B8 = _round_up(max(B, 1), 8)
    # Cap the tile at ceil(B/2) so large batches give >=2 grid steps ->
    # the "parallel" batch axis shards across both v7x TensorCores.
    half = max(8, _round_up(-(-B8 // 2), 8))
    tb = min(block_b, half)
    Bp = _round_up(B, tb)

    # Pad the batch dim only (no packing; these are no-ops when Bp == B).
    pad = Bp - B
    obs_p = jnp.pad(obs.astype(jnp.float32), ((0, pad), (0, 0)))
    act_p = jnp.pad(actions.astype(jnp.int32).reshape(B, 1), ((0, pad), (0, 0)))

    # bf16 weights on request (f32 MXU accumulation stays in-kernel).
    w1c = w1.astype(compute_dtype)
    w2c = w2.astype(compute_dtype)
    w3c = w3.astype(compute_dtype)

    out = pl.pallas_call(
        _actor_critic_kernel,
        out_shape=jax.ShapeDtypeStruct((Bp, 8), jnp.float32),
        grid=(Bp // tb,),
        in_specs=[
            pl.BlockSpec((tb, 4), lambda i: (i, 0)),      # obs tile
            pl.BlockSpec((tb, 1), lambda i: (i, 0)),      # action tile
            pl.BlockSpec((4, 128), lambda i: (0, 0)),     # layer-1 weights (resident)
            pl.BlockSpec((128, 128), lambda i: (0, 0)),   # layer-2 weights (resident)
            pl.BlockSpec((128, 128), lambda i: (0, 0)),   # head weights (resident)
            pl.BlockSpec((24, 128), lambda i: (0, 0)),    # biases (resident, f32)
        ],
        out_specs=pl.BlockSpec((tb, 8), lambda i: (i, 0)),
        compiler_params=pltpu.CompilerParams(
            dimension_semantics=("parallel",)),           # v7x: batch across 2 TCs
    )(obs_p, act_p, w1c, w2c, w3c, b_all)

    # Single read of the (already narrow) slab, then cheap splits.
    cols = out[:B, 0:4]
    values = cols[:, 0:1]
    log_prob = cols[:, 1]
    ac_prob = cols[:, 2:4]
    entropy = 0  # matches the PyTorch module (literal 0)
    return values, log_prob, entropy, ac_prob


# ----------------------------------------------------------------------------
# Deterministic parameters (orthogonal init, as in the module) + fused packing.
# ----------------------------------------------------------------------------
def _orthogonal(key, out_dim, in_dim, gain):
    rows, cols = out_dim, in_dim
    flat = jax.random.normal(key, (max(rows, cols), min(rows, cols)), jnp.float32)
    q, r = jnp.linalg.qr(flat)
    q = q * jnp.sign(jnp.diag(r))[None, :]
    if rows < cols:
        q = q.T
    return (gain * q[:rows, :cols]).astype(jnp.float32)


def make_params(seed=0):
    """Returns (raw per-layer params for the reference, packed arrays for the kernel)."""
    key = jax.random.PRNGKey(seed)
    ks = jax.random.split(key, 6)
    g = float(np.sqrt(2.0))

    def pack(w_out_in):                 # store as (in, out) so the kernel does x @ W
        return jnp.asarray(w_out_in).T

    wp1 = pack(_orthogonal(ks[0], 64, 4, g));    bp1 = jnp.zeros((64,), jnp.float32)
    wp2 = pack(_orthogonal(ks[1], 64, 64, g));   bp2 = jnp.zeros((64,), jnp.float32)
    wv1 = pack(_orthogonal(ks[2], 64, 4, g));    bv1 = jnp.zeros((64,), jnp.float32)
    wv2 = pack(_orthogonal(ks[3], 64, 64, g));   bv2 = jnp.zeros((64,), jnp.float32)
    wa = pack(_orthogonal(ks[4], 2, 64, 0.01));  ba = jnp.zeros((2,), jnp.float32)
    wvh = pack(_orthogonal(ks[5], 1, 64, 1.0));  bvh = jnp.zeros((1,), jnp.float32)

    raw = (wp1, bp1, wp2, bp2, wv1, bv1, wv2, bv2, wa, ba, wvh, bvh)

    # Fused weights: layer 1 (4,128), layer 2 block-diag (128,128), heads (128,128).
    w1 = jnp.zeros((4, 128), jnp.float32)
    w1 = w1.at[:, 0:64].set(wp1).at[:, 64:128].set(wv1)
    w2 = jnp.zeros((128, 128), jnp.float32)
    w2 = w2.at[0:64, 0:64].set(wp2).at[64:128, 64:128].set(wv2)
    w3 = jnp.zeros((128, 128), jnp.float32)
    w3 = w3.at[64:128, 0:1].set(wvh).at[0:64, 2:4].set(wa)

    # Bias slab (rows 0 / 8 / 16 -> b1 / b2 / b3, sublane-aligned), always f32.
    b_all = jnp.zeros((24, 128), jnp.float32)
    b_all = b_all.at[0, 0:64].set(bp1).at[0, 64:128].set(bv1)
    b_all = b_all.at[8, 0:64].set(bp2).at[8, 64:128].set(bv2)
    b_all = b_all.at[16, 0:1].set(bvh).at[16, 2:4].set(ba)

    return raw, (w1, w2, w3, b_all)


# ----------------------------------------------------------------------------
# Pure-JAX reference for correctness check
# ----------------------------------------------------------------------------
def reference_forward(obs, actions, raw_params):
    (wp1, bp1, wp2, bp2, wv1, bv1, wv2, bv2, wa, ba, wvh, bvh) = raw_params
    latent_pi = jnp.tanh(jnp.tanh(obs @ wp1 + bp1) @ wp2 + bp2)
    latent_vf = jnp.tanh(jnp.tanh(obs @ wv1 + bv1) @ wv2 + bv2)
    values = latent_vf @ wvh + bvh
    ac_prob = jax.nn.softmax(latent_pi @ wa + ba, axis=1)
    log_prob = jnp.take_along_axis(jnp.log(ac_prob), actions[:, None], axis=1).reshape(-1)
    return values, log_prob, ac_prob


if __name__ == "__main__":
    raw_params, packed_params = make_params(seed=0)

    # (batch, block_b, compute_dtype, tolerance):
    #  - small primary case (B=8), f32 exact parity
    #  - multi-tile case exercising the 2-step grid
    #  - non-divisible batch exercising padding
    #  - bf16 compute path (looser tolerance, MXU-native on v5e/v6e/v7x)
    cases = [
        (8, 4096, jnp.float32, 1e-5),
        (384, 256, jnp.float32, 1e-5),
        (100, 4096, jnp.float32, 1e-5),
        (8, 4096, jnp.bfloat16, 5e-2),
    ]
    for batch, blk, cdt, tol in cases:
        key = jax.random.PRNGKey(0)
        k_obs, k_act = jax.random.split(key)
        obs = jax.random.normal(k_obs, (batch, 4), jnp.float32)
        actions = jax.random.randint(k_act, (batch,), 0, 2, jnp.int32)

        values, log_prob, entropy, ac_prob = actor_critic_forward(
            obs, actions, packed_params, block_b=blk, compute_dtype=cdt)
        jax.block_until_ready((values, log_prob, ac_prob))

        ref_values, ref_log_prob, ref_ac_prob = reference_forward(obs, actions, raw_params)
        np.testing.assert_allclose(np.asarray(values), np.asarray(ref_values),
                                   rtol=tol, atol=tol)
        np.testing.assert_allclose(np.asarray(log_prob), np.asarray(ref_log_prob),
                                   rtol=tol, atol=tol)
        np.testing.assert_allclose(np.asarray(ac_prob), np.asarray(ref_ac_prob),
                                   rtol=tol, atol=tol)
        assert entropy == 0

    print("KERNEL_OK")
</pallas_src>

<mosaic_0001>
module attributes {stable_mosaic.version = 11 : i64} {
  func.func @_actor_critic_kernel(%arg0: i32, %arg1: memref<8x4xf32, #tpu.memory_space<vmem>>, %arg2: memref<8x1xi32, #tpu.memory_space<vmem>>, %arg3: memref<4x128xf32, #tpu.memory_space<vmem>>, %arg4: memref<128x128xf32, #tpu.memory_space<vmem>>, %arg5: memref<128x128xf32, #tpu.memory_space<vmem>>, %arg6: memref<24x128xf32, #tpu.memory_space<vmem>>, %arg7: memref<8x8xf32, #tpu.memory_space<vmem>>) attributes {dimension_semantics = [#tpu.dimension_semantics<parallel>], iteration_bounds = array<i64: 1>, scalar_prefetch = 0 : i64, scratch_operands = 0 : i64, tpu.core_type = #tpu.core_type<tc>, window_params = [{transform_indices = @transform_0, window_bounds = array<i64: 8, 4>}, {transform_indices = @transform_1, window_bounds = array<i64: 8, 1>}, {pipeline_mode = #tpu.pipeline_mode<synchronous>, transform_indices = @transform_2, window_bounds = array<i64: 4, 128>}, {pipeline_mode = #tpu.pipeline_mode<synchronous>, transform_indices = @transform_3, window_bounds = array<i64: 128, 128>}, {pipeline_mode = #tpu.pipeline_mode<synchronous>, transform_indices = @transform_4, window_bounds = array<i64: 128, 128>}, {pipeline_mode = #tpu.pipeline_mode<synchronous>, transform_indices = @transform_5, window_bounds = array<i64: 24, 128>}, {transform_indices = @transform_6, window_bounds = array<i64: 8, 8>}]} {
    %c0 = arith.constant 0 : index
    %c0_0 = arith.constant 0 : index
    %0 = vector.load %arg1[%c0, %c0_0] : memref<8x4xf32, #tpu.memory_space<vmem>>, vector<8x4xf32>
    %c0_1 = arith.constant 0 : index
    %c0_2 = arith.constant 0 : index
    %1 = vector.load %arg2[%c0_1, %c0_2] : memref<8x1xi32, #tpu.memory_space<vmem>>, vector<8x1xi32>
    %c0_3 = arith.constant 0 : index
    %c0_4 = arith.constant 0 : index
    %2 = vector.load %arg6[%c0_3, %c0_4] : memref<24x128xf32, #tpu.memory_space<vmem>>, vector<1x128xf32>
    %c8 = arith.constant 8 : index
    %c0_5 = arith.constant 0 : index
    %3 = vector.load %arg6[%c8, %c0_5] : memref<24x128xf32, #tpu.memory_space<vmem>>, vector<1x128xf32>
    %c16 = arith.constant 16 : index
    %c0_6 = arith.constant 0 : index
    %4 = vector.load %arg6[%c16, %c0_6] : memref<24x128xf32, #tpu.memory_space<vmem>>, vector<1x128xf32>
    %c0_7 = arith.constant 0 : index
    %c0_8 = arith.constant 0 : index
    %5 = vector.load %arg3[%c0_7, %c0_8] : memref<4x128xf32, #tpu.memory_space<vmem>>, vector<4x128xf32>
    %cst = arith.constant dense<0.000000e+00> : vector<8x128xf32>
    %6 = tpu.matmul %0, %5, %cst {dimension_numbers = #tpu.dot_dimension_numbers<[1], [0], [0], [1], [0, 0, 1, 1], [], []>} : vector<8x4xf32>, vector<4x128xf32>, vector<8x128xf32> -> vector<8x128xf32>
    %7 = vector.broadcast %2 : vector<1x128xf32> to vector<8x128xf32>
    %8 = arith.addf %6, %7 : vector<8x128xf32>
    %9 = math.tanh %8 : vector<8x128xf32>
    %c0_9 = arith.constant 0 : index
    %c0_10 = arith.constant 0 : index
    %10 = vector.load %arg4[%c0_9, %c0_10] : memref<128x128xf32, #tpu.memory_space<vmem>>, vector<128x128xf32>
    %cst_11 = arith.constant dense<0.000000e+00> : vector<8x128xf32>
    %11 = tpu.matmul %9, %10, %cst_11 {dimension_numbers = #tpu.dot_dimension_numbers<[1], [0], [0], [1], [0, 0, 1, 1], [], []>} : vector<8x128xf32>, vector<128x128xf32>, vector<8x128xf32> -> vector<8x128xf32>
    %12 = vector.broadcast %3 : vector<1x128xf32> to vector<8x128xf32>
    %13 = arith.addf %11, %12 : vector<8x128xf32>
    %14 = math.tanh %13 : vector<8x128xf32>
    %c0_12 = arith.constant 0 : index
    %c0_13 = arith.constant 0 : index
    %15 = vector.load %arg5[%c0_12, %c0_13] : memref<128x128xf32, #tpu.memory_space<vmem>>, vector<128x128xf32>
    %cst_14 = arith.constant dense<0.000000e+00> : vector<8x128xf32>
    %16 = tpu.matmul %14, %15, %cst_14 {dimension_numbers = #tpu.dot_dimension_numbers<[1], [0], [0], [1], [0, 0, 1, 1], [], []>} : vector<8x128xf32>, vector<128x128xf32>, vector<8x128xf32> -> vector<8x128xf32>
    %17 = vector.broadcast %4 : vector<1x128xf32> to vector<8x128xf32>
    %18 = arith.addf %16, %17 : vector<8x128xf32>
    %19 = vector.extract_strided_slice %18 {offsets = [0, 2], sizes = [8, 1], strides = [1, 1]} : vector<8x128xf32> to vector<8x1xf32>
    %20 = vector.extract_strided_slice %18 {offsets = [0, 3], sizes = [8, 1], strides = [1, 1]} : vector<8x128xf32> to vector<8x1xf32>
    %21 = arith.maximumf %19, %20 : vector<8x1xf32>
    %22 = arith.subf %19, %21 : vector<8x1xf32>
    %23 = math.exp %22 : vector<8x1xf32>
    %24 = arith.subf %20, %21 : vector<8x1xf32>
    %25 = math.exp %24 : vector<8x1xf32>
    %26 = arith.addf %23, %25 : vector<8x1xf32>
    %27 = math.log %26 : vector<8x1xf32>
    %28 = arith.subf %19, %21 : vector<8x1xf32>
    %29 = arith.subf %28, %27 : vector<8x1xf32>
    %30 = arith.subf %20, %21 : vector<8x1xf32>
    %31 = arith.subf %30, %27 : vector<8x1xf32>
    %32 = math.exp %29 : vector<8x1xf32>
    %33 = math.exp %31 : vector<8x1xf32>
    %c0_i32 = arith.constant 0 : i32
    %34 = vector.broadcast %c0_i32 : i32 to vector<8x1xi32>
    %35 = arith.cmpi eq, %1, %34 : vector<8x1xi32>
    %36 = arith.select %35, %29, %31 : vector<8x1xi1>, vector<8x1xf32>
    %37 = tpu.iota {dimensions = array<i32: 1>} : vector<8x8xi32>
    %38 = vector.extract_strided_slice %18 {offsets = [0, 0], sizes = [8, 8], strides = [1, 1]} : vector<8x128xf32> to vector<8x8xf32>
    %c1_i32 = arith.constant 1 : i32
    %39 = vector.broadcast %c1_i32 : i32 to vector<8x8xi32>
    %40 = arith.cmpi eq, %37, %39 : vector<8x8xi32>
    %41 = vector.shape_cast %36 : vector<8x1xf32> to vector<8x1xf32>
    %42 = vector.broadcast %41 : vector<8x1xf32> to vector<8x8xf32>
    %43 = arith.select %40, %42, %38 : vector<8x8xi1>, vector<8x8xf32>
    %c2_i32 = arith.constant 2 : i32
    %44 = vector.broadcast %c2_i32 : i32 to vector<8x8xi32>
    %45 = arith.cmpi eq, %37, %44 : vector<8x8xi32>
    %46 = vector.shape_cast %32 : vector<8x1xf32> to vector<8x1xf32>
    %47 = vector.broadcast %46 : vector<8x1xf32> to vector<8x8xf32>
    %48 = arith.select %45, %47, %43 : vector<8x8xi1>, vector<8x8xf32>
    %c3_i32 = arith.constant 3 : i32
    %49 = vector.broadcast %c3_i32 : i32 to vector<8x8xi32>
    %50 = arith.cmpi eq, %37, %49 : vector<8x8xi32>
    %51 = vector.shape_cast %33 : vector<8x1xf32> to vector<8x1xf32>
    %52 = vector.broadcast %51 : vector<8x1xf32> to vector<8x8xf32>
    %53 = arith.select %50, %52, %48 : vector<8x8xi1>, vector<8x8xf32>
    %c0_15 = arith.constant 0 : index
    %c0_16 = arith.constant 0 : index
    %54 = vector.load %arg7[%c0_15, %c0_16] : memref<8x8xf32, #tpu.memory_space<vmem>>, vector<8x8xf32>
    tpu.vector_store %arg7[%c0_15, %c0_16], %53 {strides = array<i32>} : memref<8x8xf32, #tpu.memory_space<vmem>>, vector<8x8xf32>,
    return
  }
  func.func @transform_0(%arg0: i32) -> (i32, i32) {
    %c0_i32 = arith.constant 0 : i32
    %c0_i32_0 = arith.constant 0 : i32
    return %arg0, %c0_i32 : i32, i32
  }
  func.func @transform_1(%arg0: i32) -> (i32, i32) {
    %c0_i32 = arith.constant 0 : i32
    %c0_i32_0 = arith.constant 0 : i32
    return %arg0, %c0_i32 : i32, i32
  }
  func.func @transform_2(%arg0: i32) -> (i32, i32) {
    %c0_i32 = arith.constant 0 : i32
    %c0_i32_0 = arith.constant 0 : i32
    %c0_i32_1 = arith.constant 0 : i32
    return %c0_i32, %c0_i32_0 : i32, i32
  }
  func.func @transform_3(%arg0: i32) -> (i32, i32) {
    %c0_i32 = arith.constant 0 : i32
    %c0_i32_0 = arith.constant 0 : i32
    %c0_i32_1 = arith.constant 0 : i32
    return %c0_i32, %c0_i32_0 : i32, i32
  }
  func.func @transform_4(%arg0: i32) -> (i32, i32) {
    %c0_i32 = arith.constant 0 : i32
    %c0_i32_0 = arith.constant 0 : i32
    %c0_i32_1 = arith.constant 0 : i32
    return %c0_i32, %c0_i32_0 : i32, i32
  }
  func.func @transform_5(%arg0: i32) -> (i32, i32) {
    %c0_i32 = arith.constant 0 : i32
    %c0_i32_0 = arith.constant 0 : i32
    %c0_i32_1 = arith.constant 0 : i32
    return %c0_i32, %c0_i32_0 : i32, i32
  }
  func.func @transform_6(%arg0: i32) -> (i32, i32) {
    %c0_i32 = arith.constant 0 : i32
    %c0_i32_0 = arith.constant 0 : i32
    return %arg0, %c0_i32 : i32, i32
  }
}

</mosaic_0001>

<llo_original>
// kernel: actor_critic_forward.1
$region0: #{actor_critic_forward.1}
  #allocation0 [shape = 'u32[]', space=smem, size = 0x4, offset = 0x4, fixed_abs, tag = 'smem constant byte address 0x4 - core index']
  #allocation1 [shape = 'u32[72,128]{1,0:T(1,128)}', space=vmem, size = 0x9000, scoped, tag = 'internal scratch']
  %s0 = inlined_call_operand.vmem [shape: f32[8,4], index: 0, kind: input, shape index: {}]
  %s1 = inlined_call_operand.vmem [shape: s32[8,1], index: 1, kind: input, shape index: {}]
  %s2 = inlined_call_operand.vmem [shape: f32[4,128], index: 2, kind: input, shape index: {}]
  %s3 = inlined_call_operand.hbm [shape: f32[128,128], index: 3, kind: input, shape index: {}]
  %s4 = inlined_call_operand.hbm [shape: f32[128,128], index: 4, kind: input, shape index: {}]
  %s5 = inlined_call_operand.hbm [shape: f32[24,128], index: 5, kind: input, shape index: {}]
  %s6 = inlined_call_operand.vmem [shape: f32[8,8], index: 6, kind: output, shape index: {}]
  %s7 = sld [smem:[#allocation0]]
  $region46: #{actor_critic_forward.1} parent=0
    _
  %s9 = ssub.s32 1, %s7
  %s10 = scalar_select 0, %s9, %s7
  $region1: #{actor_critic_forward.1} parent=0
    #allocation2 [shape = 'u8[65536]{0}', space=vmem, size = 0x10000, scoped, tag = 'input window, operand 3, single buffered']
    #allocation3 [shape = 's32[1]{0}', space=sflag, size = 0x4, scoped, tag = 'scoped memory for actor_critic_forward.1']
    #allocation4 [shape = 'u8[65536]{0}', space=vmem, size = 0x10000, scoped, tag = 'input window, operand 4, single buffered']
    #allocation5 [shape = 's32[1]{0}', space=sflag, size = 0x4, scoped, tag = 'scoped memory for actor_critic_forward.1']
    #allocation6 [shape = 'u8[12288]{0}', space=vmem, size = 0x3000, scoped, tag = 'input window, operand 5, single buffered']
    %11 = vsyncpa [#allocation3], 0
    %12 = vsyncpa [#allocation5], 0
    // Predicated region
    $region2: #{actor_critic_forward.1} parent=1 // pred_check
      _
    $region3: #{actor_critic_forward.1} parent=1 // pred_check_branch
      %14 = sbr.rel (0) target = $region5
    $region4: #{actor_critic_forward.1} parent=1 // pred_region
      _
    $region5: #{actor_critic_forward.1} parent=1 // pred_fallthru
      _
    // Predicated region
    $region6: #{actor_critic_forward.1} parent=1 // pred_check
      _
    $region7: #{actor_critic_forward.1} parent=1 // pred_check_branch
      %16 = sbr.rel (0) target = $region9
    $region8: #{actor_critic_forward.1} parent=1 // pred_region
      _
    $region9: #{actor_critic_forward.1} parent=1 // pred_fallthru
      _
    // Predicated region
    $region10: #{actor_critic_forward.1} parent=1 // pred_check
      _
    $region11: #{actor_critic_forward.1} parent=1 // pred_check_branch
      %18 = sbr.rel (0) target = $region13
    $region12: #{actor_critic_forward.1} parent=1 // pred_region
      _
    $region13: #{actor_critic_forward.1} parent=1 // pred_fallthru
      _
    // Predicated region
    $region14: #{actor_critic_forward.1} parent=1 // pred_check
      _
    $region15: #{actor_critic_forward.1} parent=1 // pred_check_branch
      %20 = sbr.rel (0) target = $region17
    $region16: #{actor_critic_forward.1} parent=1 // pred_region
      %22 = vsyncadd [#allocation3], 0
      %s23 = sshll.u32 %s3, 4
      %s24 = int_to_ptr.hbm [resolvable:$true] %s23
      %s25 = sshll.u32 [#allocation2], 4
      %s26 = int_to_ptr.vmem [resolvable:$true] %s25
      %31 = dma.hbm_to_vmem [thread:$0]  %s24, 2048, %s26, [#allocation3], 128, 128, 8
    $region17: #{actor_critic_forward.1} parent=1 // pred_fallthru
      _
    // Predicated region
    $region18: #{actor_critic_forward.1} parent=1 // pred_check
      _
    $region19: #{actor_critic_forward.1} parent=1 // pred_check_branch
      %33 = sbr.rel (0) target = $region21
    $region20: #{actor_critic_forward.1} parent=1 // pred_region
      %35 = vsyncadd [#allocation5], 0
      %s36 = sshll.u32 %s4, 4
      %s37 = int_to_ptr.hbm [resolvable:$true] %s36
      %s38 = sshll.u32 [#allocation4], 4
      %s39 = int_to_ptr.vmem [resolvable:$true] %s38
      %44 = dma.hbm_to_vmem [thread:$0]  %s37, 2048, %s39, [#allocation5], 128, 128, 8
    $region21: #{actor_critic_forward.1} parent=1 // pred_fallthru
      _
    // Predicated region
    $region22: #{actor_critic_forward.1} parent=1 // pred_check
      _
    $region23: #{actor_critic_forward.1} parent=1 // pred_check_branch
      %46 = sbr.rel (0) target = $region25
    $region24: #{actor_critic_forward.1} parent=1 // pred_region
      %48 = vsyncadd [#allocation5], 0
      %s49 = sshll.u32 %s5, 4
      %s50 = int_to_ptr.hbm [resolvable:$true] %s49
      %s51 = sshll.u32 [#allocation6], 4
      %s52 = int_to_ptr.vmem [resolvable:$true] %s51
      %57 = dma.hbm_to_vmem [thread:$0]  %s50, 384, %s52, [#allocation5], 128, 128, 8
    $region25: #{actor_critic_forward.1} parent=1 // pred_fallthru
      _
    // Predicated region
    $region26: #{actor_critic_forward.1} parent=1 // pred_check
      _
    $region27: #{actor_critic_forward.1} parent=1 // pred_check_branch
      %59 = sbr.rel (0) target = $region29
    $region28: #{actor_critic_forward.1} parent=1 // pred_region
      %61 = dma.done [#allocation3], 2048
    $region29: #{actor_critic_forward.1} parent=1 // pred_fallthru
      _
    // Predicated region
    $region30: #{actor_critic_forward.1} parent=1 // pred_check
      _
    $region31: #{actor_critic_forward.1} parent=1 // pred_check_branch
      %63 = sbr.rel (0) target = $region33
    $region32: #{actor_critic_forward.1} parent=1 // pred_region
      %65 = dma.done [#allocation5], 2048
    $region33: #{actor_critic_forward.1} parent=1 // pred_fallthru
      _
    // Predicated region
    $region34: #{actor_critic_forward.1} parent=1 // pred_check
      _
    $region35: #{actor_critic_forward.1} parent=1 // pred_check_branch
      %67 = sbr.rel (0) target = $region37
    $region36: #{actor_critic_forward.1} parent=1 // pred_region
      %69 = dma.done [#allocation5], 384
    $region37: #{actor_critic_forward.1} parent=1 // pred_fallthru
      _
    %v70 = vld [vmem:[%s0] sm:$0xff]
    %v71 = vld [vmem:[%s1] sm:$0xff]
    %v72 = vld [vmem:[#allocation6] sm:$0x1]
    %v73 = vld [vmem:[#allocation6 + $0x8] sm:$0x1]
    %v74 = vld [vmem:[#allocation6 + $0x10] sm:$0x1]
    %v75 = vld [vmem:[%s2] sm:$0xf]
    %v76 = vperm.slane %v72, 0
    %vm77 = vcmask 31744
    %v79 = vsel %vm77, %v70, 0
    %vm81 = vcmask 1043456
    %v83 = vsel %vm81, %v75, 0
    %85 = vmatpush.msra.mxu0 0.0
    %86 = vmatpush.msra.mxu0 0.0
    %87 = vmatpush.msra.mxu0 0.0
    %88 = vmatpush.msra.mxu0 0.0
    %89 = vmatpush.msra.mxu0 0.0
    %90 = vmatpush.msra.mxu0 0.0
    %91 = vmatpush.msra.mxu0 0.0
    %92 = vmatpush.msra.mxu0 0.0
    %93 = vmatpush.msra.mxu0 0.0
    %94 = vmatpush.msra.mxu0 0.0
    %95 = vmatpush.msra.mxu0 0.0
    %96 = vmatpush.msra.mxu0 0.0
    %97 = vmatpush.msra.mxu0 0.0
    %98 = vmatpush.msra.mxu0 0.0
    %99 = vmatpush.msra.mxu0 0.0
    %100 = vmatpush.msra.mxu0 %v83
    %101 = vmatmul.f32.gmra.mxu0 %v79
    %v102 = vpop.f32.mrf.mxu0
    %v103 = vadd.f32 %v76, %v102
    %104 = vdwg.mxu0
    %v105 = vtanh.pop %v103
    %v106 = vld [vmem:[#allocation2] sm:$0xff]
    %v107 = vld [vmem:[#allocation2 + $0x8] sm:$0xff]
    %v108 = vld [vmem:[#allocation2 + $0x10] sm:$0xff]
    %v109 = vld [vmem:[#allocation2 + $0x18] sm:$0xff]
    %v110 = vld [vmem:[#allocation2 + $0x20] sm:$0xff]
    %v111 = vld [vmem:[#allocation2 + $0x28] sm:$0xff]
    %v112 = vld [vmem:[#allocation2 + $0x30] sm:$0xff]
    %v113 = vld [vmem:[#allocation2 + $0x38] sm:$0xff]
    %v114 = vld [vmem:[#allocation2 + $0x40] sm:$0xff]
    %v115 = vld [vmem:[#allocation2 + $0x48] sm:$0xff]
    %v116 = vld [vmem:[#allocation2 + $0x50] sm:$0xff]
    %v117 = vld [vmem:[#allocation2 + $0x58] sm:$0xff]
    %v118 = vld [vmem:[#allocation2 + $0x60] sm:$0xff]
    %v119 = vld [vmem:[#allocation2 + $0x68] sm:$0xff]
    %v120 = vld [vmem:[#allocation2 + $0x70] sm:$0xff]
    %v121 = vld [vmem:[#allocation2 + $0x78] sm:$0xff]
    %v122 = vperm.slane %v73, 0
    %123 = vmatpush.msra.mxu0 %v121
    %124 = vmatpush.msra.mxu0 %v120
    %125 = vmatpush.msra.mxu0 %v119
    %126 = vmatpush.msra.mxu0 %v118
    %127 = vmatpush.msra.mxu0 %v117
    %128 = vmatpush.msra.mxu0 %v116
    %129 = vmatpush.msra.mxu0 %v115
    %130 = vmatpush.msra.mxu0 %v114
    %131 = vmatpush.msra.mxu0 %v113
    %132 = vmatpush.msra.mxu0 %v112
    %133 = vmatpush.msra.mxu0 %v111
    %134 = vmatpush.msra.mxu0 %v110
    %135 = vmatpush.msra.mxu0 %v109
    %136 = vmatpush.msra.mxu0 %v108
    %137 = vmatpush.msra.mxu0 %v107
    %138 = vmatpush.msra.mxu0 %v106
    %139 = vmatmul.f32.gmra.mxu0 %v105
    %v140 = vpop.f32.mrf.mxu0
    %v141 = vadd.f32 %v122, %v140
    %142 = vdwg.mxu0
    %v143 = vtanh.pop %v141
    %v144 = vld [vmem:[#allocation4] sm:$0xff]
    %v145 = vld [vmem:[#allocation4 + $0x8] sm:$0xff]
    %v146 = vld [vmem:[#allocation4 + $0x10] sm:$0xff]
    %v147 = vld [vmem:[#allocation4 + $0x18] sm:$0xff]
    %v148 = vld [vmem:[#allocation4 + $0x20] sm:$0xff]
    %v149 = vld [vmem:[#allocation4 + $0x28] sm:$0xff]
    %v150 = vld [vmem:[#allocation4 + $0x30] sm:$0xff]
    %v151 = vld [vmem:[#allocation4 + $0x38] sm:$0xff]
    %v152 = vld [vmem:[#allocation4 + $0x40] sm:$0xff]
    %v153 = vld [vmem:[#allocation4 + $0x48] sm:$0xff]
    %v154 = vld [vmem:[#allocation4 + $0x50] sm:$0xff]
    %v155 = vld [vmem:[#allocation4 + $0x58] sm:$0xff]
    %v156 = vld [vmem:[#allocation4 + $0x60] sm:$0xff]
    %v157 = vld [vmem:[#allocation4 + $0x68] sm:$0xff]
    %v158 = vld [vmem:[#allocation4 + $0x70] sm:$0xff]
    %v159 = vld [vmem:[#allocation4 + $0x78] sm:$0xff]
    %v160 = vperm.slane %v74, 0
    %161 = vmatpush.msra.mxu0 %v159
    %162 = vmatpush.msra.mxu0 %v158
    %163 = vmatpush.msra.mxu0 %v157
    %164 = vmatpush.msra.mxu0 %v156
    %165 = vmatpush.msra.mxu0 %v155
    %166 = vmatpush.msra.mxu0 %v154
    %167 = vmatpush.msra.mxu0 %v153
    %168 = vmatpush.msra.mxu0 %v152
    %169 = vmatpush.msra.mxu0 %v151
    %170 = vmatpush.msra.mxu0 %v150
    %171 = vmatpush.msra.mxu0 %v149
    %172 = vmatpush.msra.mxu0 %v148
    %173 = vmatpush.msra.mxu0 %v147
    %174 = vmatpush.msra.mxu0 %v146
    %175 = vmatpush.msra.mxu0 %v145
    %176 = vmatpush.msra.mxu0 %v144
    %177 = vmatmul.f32.gmra.mxu0 %v143
    %v178 = vpop.f32.mrf.mxu0
    %v179 = vadd.f32 %v160, %v178
    %180 = vdwg.mxu0
    %182 = vrot.lane.b32.xlu0 %v179, 127
    %v183 = vpop.permute.xlu0 %182
    %v185 = vmax.f32 %v179, %v183
    %v186 = vsub.f32 %v179, %v185
    %v187 = vmul.f32 %v186, 1.442695
    %v188 = vpow.pop %v187
    %190 = vrot.lane.b32.xlu0 %v185, 1
    %v191 = vpop.permute.xlu0 %190
    %v193 = vsub.f32 %v179, %v191
    %v194 = vmul.f32 %v193, 1.442695
    %v195 = vpow.pop %v194
    %197 = vrot.lane.b32.xlu0 %v195, 127
    %v198 = vpop.permute.xlu0 %197
    %v200 = vadd.f32 %v188, %v198
    %v201 = vlog2.pop %v200
    %v202 = vmul.f32 %v201, 0.6931472
    %v203 = vsub.f32 %v186, %v202
    %205 = vrot.lane.b32.xlu0 %v202, 1
    %v206 = vpop.permute.xlu0 %205
    %v208 = vsub.f32 %v193, %v206
    %v209 = vmul.f32 %v203, 1.442695
    %v210 = vpow.pop %v209
    %v211 = vmul.f32 %v208, 1.442695
    %v212 = vpow.pop %v211
    %vm213 = vcmp.eq.s32.totalorder %v71, 0
    %215 = vrot.lane.b32.xlu0 %v203, 126
    %v216 = vpop.permute.xlu0 %215
    %219 = vrot.lane.b32.xlu0 %v208, 125
    %v220 = vpop.permute.xlu0 %219
    %v222 = vsel %vm213, %v216, %v220
    %v223 = vlaneseq
    %v224 = vand.u32 %v223, 127
    %vm225 = vcmp.eq.s32.totalorder %v224, 1
    %227 = vset.pattern.permute.xlu0 0
    %228 = vperm.xlu0 %227, %v222
    %v229 = vpop.permute.xlu0 %228
    %v231 = vsel %vm225, %v229, %v179
    %vm232 = vcmp.eq.s32.totalorder %v224, 2
    %234 = vset.pattern.permute.xlu0 2
    %235 = vperm.xlu0 %234, %v210
    %v236 = vpop.permute.xlu0 %235
    %v238 = vsel %vm232, %v236, %v231
    %vm239 = vcmp.eq.s32.totalorder %v224, 3
    %241 = vset.pattern.permute.xlu0 3
    %242 = vperm.xlu0 %241, %v212
    %v243 = vpop.permute.xlu0 %242
    %v245 = vsel %vm239, %v243, %v238
    %vm246 = vcmask 64512
    %247 = vst.msk [vmem:[%s6] sm:$0xff] %vm246, %v245
    // Predicated region
    $region38: #{actor_critic_forward.1} parent=1 // pred_check
      _
    $region39: #{actor_critic_forward.1} parent=1 // pred_check_branch
      %249 = sbr.rel (0) target = $region41
    $region40: #{actor_critic_forward.1} parent=1 // pred_region
      _
    $region41: #{actor_critic_forward.1} parent=1 // pred_fallthru
      _
    // Predicated region
    $region42: #{actor_critic_forward.1} parent=1 // pred_check
      _
    $region43: #{actor_critic_forward.1} parent=1 // pred_check_branch
      %251 = sbr.rel (0) target = $region45
    $region44: #{actor_critic_forward.1} parent=1 // pred_region
      _
    $region45: #{actor_critic_forward.1} parent=1 // pred_fallthru
      _
    %252 = vsyncpa [#allocation3], 1
    %253 = vsyncpa [#allocation5], 1

</llo_original>
